<compile_context>
chip_gen: v7x
topology: tpu7x:2x2x1
jax: 0.10.0
libtpu: 0.0.40
codegen_flags: <defaults>
</compile_context>

<pallas_src>
import functools

import jax
import jax.numpy as jnp
from jax.experimental import pallas as pl
from jax.experimental.pallas import tpu as pltpu

_LANE = 128
_SUBLANE = 8
_MAX_TILE_DEFAULT = 8192   # per-step x DMA = 32*tile bytes; padded VMEM block ~4 MiB
_TARGET_GRID_STEPS = 4     # keep both v7x TensorCores busy (>=2 steps each)


def _round_up(n, m):
    return ((n + m - 1) // m) * m


def _padded_vmem_bytes(shape, itemsize):
    """Conservative VMEM footprint of a 2-D block (sublane/lane padding)."""
    r, c = shape
    return _round_up(max(r, 1), _SUBLANE) * _round_up(max(c, 1), _LANE) * itemsize


def _mlp_kernel(x_ref, w1_ref, b1_ref, w2_ref, b2_ref,
                w3_ref, b3_ref, w4_ref, b4_ref, o_ref):
    """Fused forward for one batch tile.

    x_ref: [batch_tile, n_input] (batch-major, as stored in HBM).
    Hidden activations / output are feature-major [features, batch_tile] so the
    batch lives on the lane axis (lane-dense output stores for n_output == 1).
    """
    x = x_ref[...].astype(jnp.float32)          # [bt, n_input]
    # Orientation flip happens here, on VMEM-resident data, overlapped with the
    # next tile's input DMA -- instead of a separate XLA transpose HBM pass.
    # TODO(synk): check the bundle for the cost of this in-kernel [bt, n_input]
    # transpose; if it shows up, switch the caller contract to feature-major x.
    x_fm = x.T                                   # [n_input, bt]

    # NOTE: at the shipped dims (8/32/32/32/1) the MXU is <2-7% occupied; the
    # kernel is HBM/overhead-bound, so weights stay f32.
    h = jnp.dot(w1_ref[...], x_fm, preferred_element_type=jnp.float32)
    h = jnp.maximum(h + b1_ref[...], 0.0)

    h = jnp.dot(w2_ref[...], h, preferred_element_type=jnp.float32)
    h = jnp.maximum(h + b2_ref[...], 0.0)

    h = jnp.dot(w3_ref[...], h, preferred_element_type=jnp.float32)
    h = jnp.maximum(h + b3_ref[...], 0.0)

    # TODO(synk): if a v5e bundle dump shows the vector-store slot saturating on
    # the [32, bt] layer intermediates, chunk the body with
    # lax.fori_loop(..., unroll=True) over 128-256 lane slices so h stays in vregs.
    out = jnp.dot(w4_ref[...], h, preferred_element_type=jnp.float32) + b4_ref[...]
    o_ref[...] = out.astype(o_ref.dtype)         # [n_output, bt], lane-dense


def _default_batch_tile(B):
    # Lane-aligned (batch is the lane axis of the activations/output).  Aim for
    # >= _TARGET_GRID_STEPS steps so "parallel" can shard across v7x's 2 TCs,
    # capped so the (conservatively lane-padded) x block stays ~4 MiB/buffer.
    tile = _round_up(pl.cdiv(B, _TARGET_GRID_STEPS), _LANE)
    return max(_LANE, min(tile, _MAX_TILE_DEFAULT))


@functools.partial(jax.jit, static_argnames=("batch_tile", "min_pallas_batch"))
def value_approx_forward(x, params, *, batch_tile=None, min_pallas_batch=1024):
    """ValueApprox forward: x [B, n_input] (f32 or bf16) -> [B, n_output] f32.

    params: w1..w4 in nn.Linear layout [out, in]; b1..b4 as [out, 1].
    """
    B, n_input = x.shape
    n_output = params["w4"].shape[0]

    # Fused pure-XLA path for small batches: Pallas launch + wrapper ops would
    # dominate there, and the MXU is never the bottleneck at these dims.
    if B < min_pallas_batch:
        return reference_forward(x, params).astype(jnp.float32)

    if batch_tile is None:
        batch_tile = _default_batch_tile(B)
    assert batch_tile % _LANE == 0, "batch_tile must be a multiple of 128 (lane axis)"
    assert batch_tile <= 16384, "batch_tile > 16384 exceeds the VMEM budget below"

    grid = (pl.cdiv(B, batch_tile),)             # partial last block is masked by Pallas

    param_order = ("w1", "b1", "w2", "b2", "w3", "b3", "w4", "b4")
    x_spec = pl.BlockSpec((batch_tile, n_input), lambda i: (i, 0))
    # Grid-invariant parameter blocks (constant index_map): the pipeline keeps
    # the already-fetched block and does not re-issue their DMAs per step.
    param_specs = [pl.BlockSpec(params[k].shape, lambda i: (0, 0)) for k in param_order]
    out_spec = pl.BlockSpec((n_output, batch_tile), lambda i: (0, i))

    # VMEM budget from the real (padding-conservative) working set: double-
    # buffered x/out tiles + params + ~4 hidden-width intermediates + headroom.
    # Clamp to 24..48 MiB -- never request v7x's full 64 MiB per-TC VMEM.
    x_blk = _padded_vmem_bytes((batch_tile, n_input), jnp.dtype(x.dtype).itemsize)
    o_blk = _padded_vmem_bytes((n_output, batch_tile), 4)
    p_blk = sum(_padded_vmem_bytes(params[k].shape, 4) for k in param_order)
    max_hidden = max(params["w1"].shape[0], params["w2"].shape[0],
                     params["w3"].shape[0])
    act_bytes = 4 * _padded_vmem_bytes((max_hidden, batch_tile), 4)
    vmem_limit = 2 * (x_blk + o_blk + p_blk) + act_bytes + (8 << 20)
    vmem_limit = int(min(48 << 20, max(24 << 20, vmem_limit)))

    out_t = pl.pallas_call(
        _mlp_kernel,
        out_shape=jax.ShapeDtypeStruct((n_output, B), jnp.float32),
        grid=grid,
        in_specs=[x_spec] + param_specs,
        out_specs=out_spec,
        compiler_params=pltpu.CompilerParams(
            dimension_semantics=("parallel",),
            vmem_limit_bytes=vmem_limit),
    )(x, *[params[k] for k in param_order])

    return out_t.T                               # [B, n_output]; only 4*B*n_output bytes


def init_params(key, n_input, n_hidden1, n_hidden2, n_hidden3, n_output):
    """nn.Linear-style init U(-1/sqrt(fan_in), 1/sqrt(fan_in)); w: [out, in], b: [out, 1]."""
    dims = [(n_input, n_hidden1), (n_hidden1, n_hidden2),
            (n_hidden2, n_hidden3), (n_hidden3, n_output)]
    params = {}
    keys = jax.random.split(key, 2 * len(dims))
    for idx, (fan_in, fan_out) in enumerate(dims):
        bound = 1.0 / (fan_in ** 0.5)
        w = jax.random.uniform(keys[2 * idx], (fan_out, fan_in),
                               minval=-bound, maxval=bound, dtype=jnp.float32)
        b = jax.random.uniform(keys[2 * idx + 1], (fan_out, 1),
                               minval=-bound, maxval=bound, dtype=jnp.float32)
        params[f"w{idx + 1}"] = w
        params[f"b{idx + 1}"] = b
    return params


def reference_forward(x, params):
    h = jnp.maximum(x @ params["w1"].T + params["b1"].T, 0.0)
    h = jnp.maximum(h @ params["w2"].T + params["b2"].T, 0.0)
    h = jnp.maximum(h @ params["w3"].T + params["b3"].T, 0.0)
    return h @ params["w4"].T + params["b4"].T


if __name__ == "__main__":
    # Small shapes implied by the module: ValueApprox(n_input, h1, h2, h3, n_output, ...)
    n_input, n_hidden1, n_hidden2, n_hidden3, n_output = 8, 32, 32, 32, 1

    key = jax.random.PRNGKey(0)
    k1, k2, k3, kp = jax.random.split(key, 4)
    params = init_params(kp, n_input, n_hidden1, n_hidden2, n_hidden3, n_output)

    # 1) Multi-step "parallel" grid (default tile -> 128, 4 steps), no wrapper x.T/pad.
    x1 = jax.random.normal(k1, (512, n_input), dtype=jnp.float32)
    o1 = jax.block_until_ready(value_approx_forward(x1, params, min_pallas_batch=0))
    assert o1.shape == (512, n_output)
    assert jnp.allclose(o1, reference_forward(x1, params), atol=1e-4, rtol=1e-4)

    # 2) Ragged batch + explicit tile: exercises Pallas partial-block masking.
    x2 = jax.random.normal(k2, (200, n_input), dtype=jnp.float32)
    o2 = jax.block_until_ready(
        value_approx_forward(x2, params, batch_tile=128, min_pallas_batch=0))
    assert o2.shape == (200, n_output)
    assert jnp.allclose(o2, reference_forward(x2, params), atol=1e-4, rtol=1e-4)

    # 3) bf16 activations accepted directly (no wrapper cast; kernel upcasts in VMEM).
    x3 = jax.random.normal(k3, (384, n_input), dtype=jnp.float32).astype(jnp.bfloat16)
    o3 = jax.block_until_ready(value_approx_forward(x3, params, min_pallas_batch=0))
    assert o3.shape == (384, n_output)
    assert jnp.allclose(o3, reference_forward(x3, params), atol=1e-4, rtol=1e-4)

    # 4) Small-batch dispatch takes the fused pure-XLA fallback.
    o4 = jax.block_until_ready(value_approx_forward(x2, params))
    assert o4.shape == (200, n_output)
    assert jnp.allclose(o4, reference_forward(x2, params), atol=1e-4, rtol=1e-4)

    print("KERNEL_OK")
</pallas_src>

<mosaic_0001>
module attributes {stable_mosaic.version = 11 : i64} {
  func.func @_mlp_kernel(%arg0: i32, %arg1: memref<128x8xf32, #tpu.memory_space<vmem>>, %arg2: memref<32x8xf32, #tpu.memory_space<vmem>>, %arg3: memref<32x1xf32, #tpu.memory_space<vmem>>, %arg4: memref<32x32xf32, #tpu.memory_space<vmem>>, %arg5: memref<32x1xf32, #tpu.memory_space<vmem>>, %arg6: memref<32x32xf32, #tpu.memory_space<vmem>>, %arg7: memref<32x1xf32, #tpu.memory_space<vmem>>, %arg8: memref<1x32xf32, #tpu.memory_space<vmem>>, %arg9: memref<1x1xf32, #tpu.memory_space<vmem>>, %arg10: memref<1x128xf32, #tpu.memory_space<vmem>>) attributes {dimension_semantics = [#tpu.dimension_semantics<parallel>], iteration_bounds = array<i64: 4>, scalar_prefetch = 0 : i64, scratch_operands = 0 : i64, tpu.core_type = #tpu.core_type<tc>, window_params = [{transform_indices = @transform_0, window_bounds = array<i64: 128, 8>}, {pipeline_mode = #tpu.pipeline_mode<synchronous>, transform_indices = @transform_1, window_bounds = array<i64: 32, 8>}, {pipeline_mode = #tpu.pipeline_mode<synchronous>, transform_indices = @transform_2, window_bounds = array<i64: 32, 1>}, {pipeline_mode = #tpu.pipeline_mode<synchronous>, transform_indices = @transform_3, window_bounds = array<i64: 32, 32>}, {pipeline_mode = #tpu.pipeline_mode<synchronous>, transform_indices = @transform_4, window_bounds = array<i64: 32, 1>}, {pipeline_mode = #tpu.pipeline_mode<synchronous>, transform_indices = @transform_5, window_bounds = array<i64: 32, 32>}, {pipeline_mode = #tpu.pipeline_mode<synchronous>, transform_indices = @transform_6, window_bounds = array<i64: 32, 1>}, {pipeline_mode = #tpu.pipeline_mode<synchronous>, transform_indices = @transform_7, window_bounds = array<i64: 1, 32>}, {pipeline_mode = #tpu.pipeline_mode<synchronous>, transform_indices = @transform_8, window_bounds = array<i64: 1, 1>}, {transform_indices = @transform_9, window_bounds = array<i64: 1, 128>}]} {
    %c0 = arith.constant 0 : index
    %c0_0 = arith.constant 0 : index
    %0 = vector.load %arg1[%c0, %c0_0] : memref<128x8xf32, #tpu.memory_space<vmem>>, vector<128x8xf32>
    %1 = tpu.transpose %0, [1, 0] : vector<128x8xf32> -> vector<8x128xf32>
    %c0_1 = arith.constant 0 : index
    %c0_2 = arith.constant 0 : index
    %2 = vector.load %arg2[%c0_1, %c0_2] : memref<32x8xf32, #tpu.memory_space<vmem>>, vector<32x8xf32>
    %cst = arith.constant dense<0.000000e+00> : vector<32x128xf32>
    %3 = tpu.matmul %2, %1, %cst {dimension_numbers = #tpu.dot_dimension_numbers<[1], [0], [0], [1], [0, 0, 1, 1], [], []>} : vector<32x8xf32>, vector<8x128xf32>, vector<32x128xf32> -> vector<32x128xf32>
    %c0_3 = arith.constant 0 : index
    %c0_4 = arith.constant 0 : index
    %4 = vector.load %arg3[%c0_3, %c0_4] : memref<32x1xf32, #tpu.memory_space<vmem>>, vector<32x1xf32>
    %5 = vector.broadcast %4 : vector<32x1xf32> to vector<32x128xf32>
    %6 = arith.addf %3, %5 : vector<32x128xf32>
    %cst_5 = arith.constant 0.000000e+00 : f32
    %7 = vector.broadcast %cst_5 : f32 to vector<32x128xf32>
    %8 = arith.maximumf %6, %7 : vector<32x128xf32>
    %c0_6 = arith.constant 0 : index
    %c0_7 = arith.constant 0 : index
    %9 = vector.load %arg4[%c0_6, %c0_7] : memref<32x32xf32, #tpu.memory_space<vmem>>, vector<32x32xf32>
    %cst_8 = arith.constant dense<0.000000e+00> : vector<32x128xf32>
    %10 = tpu.matmul %9, %8, %cst_8 {dimension_numbers = #tpu.dot_dimension_numbers<[1], [0], [0], [1], [0, 0, 1, 1], [], []>} : vector<32x32xf32>, vector<32x128xf32>, vector<32x128xf32> -> vector<32x128xf32>
    %c0_9 = arith.constant 0 : index
    %c0_10 = arith.constant 0 : index
    %11 = vector.load %arg5[%c0_9, %c0_10] : memref<32x1xf32, #tpu.memory_space<vmem>>, vector<32x1xf32>
    %12 = vector.broadcast %11 : vector<32x1xf32> to vector<32x128xf32>
    %13 = arith.addf %10, %12 : vector<32x128xf32>
    %cst_11 = arith.constant 0.000000e+00 : f32
    %14 = vector.broadcast %cst_11 : f32 to vector<32x128xf32>
    %15 = arith.maximumf %13, %14 : vector<32x128xf32>
    %c0_12 = arith.constant 0 : index
    %c0_13 = arith.constant 0 : index
    %16 = vector.load %arg6[%c0_12, %c0_13] : memref<32x32xf32, #tpu.memory_space<vmem>>, vector<32x32xf32>
    %cst_14 = arith.constant dense<0.000000e+00> : vector<32x128xf32>
    %17 = tpu.matmul %16, %15, %cst_14 {dimension_numbers = #tpu.dot_dimension_numbers<[1], [0], [0], [1], [0, 0, 1, 1], [], []>} : vector<32x32xf32>, vector<32x128xf32>, vector<32x128xf32> -> vector<32x128xf32>
    %c0_15 = arith.constant 0 : index
    %c0_16 = arith.constant 0 : index
    %18 = vector.load %arg7[%c0_15, %c0_16] : memref<32x1xf32, #tpu.memory_space<vmem>>, vector<32x1xf32>
    %19 = vector.broadcast %18 : vector<32x1xf32> to vector<32x128xf32>
    %20 = arith.addf %17, %19 : vector<32x128xf32>
    %cst_17 = arith.constant 0.000000e+00 : f32
    %21 = vector.broadcast %cst_17 : f32 to vector<32x128xf32>
    %22 = arith.maximumf %20, %21 : vector<32x128xf32>
    %c0_18 = arith.constant 0 : index
    %c0_19 = arith.constant 0 : index
    %23 = vector.load %arg8[%c0_18, %c0_19] : memref<1x32xf32, #tpu.memory_space<vmem>>, vector<1x32xf32>
    %cst_20 = arith.constant dense<0.000000e+00> : vector<1x128xf32>
    %24 = tpu.matmul %23, %22, %cst_20 {dimension_numbers = #tpu.dot_dimension_numbers<[1], [0], [0], [1], [0, 0, 1, 1], [], []>} : vector<1x32xf32>, vector<32x128xf32>, vector<1x128xf32> -> vector<1x128xf32>
    %c0_21 = arith.constant 0 : index
    %c0_22 = arith.constant 0 : index
    %25 = vector.load %arg9[%c0_21, %c0_22] : memref<1x1xf32, #tpu.memory_space<vmem>>, vector<1x1xf32>
    %26 = vector.broadcast %25 : vector<1x1xf32> to vector<1x128xf32>
    %27 = arith.addf %24, %26 : vector<1x128xf32>
    %c0_23 = arith.constant 0 : index
    %c0_24 = arith.constant 0 : index
    %28 = vector.load %arg10[%c0_23, %c0_24] : memref<1x128xf32, #tpu.memory_space<vmem>>, vector<1x128xf32>
    tpu.vector_store %arg10[%c0_23, %c0_24], %27 {strides = array<i32>} : memref<1x128xf32, #tpu.memory_space<vmem>>, vector<1x128xf32>,
    return
  }
  func.func @transform_0(%arg0: i32) -> (i32, i32) {
    %c0_i32 = arith.constant 0 : i32
    %c0_i32_0 = arith.constant 0 : i32
    return %arg0, %c0_i32 : i32, i32
  }
  func.func @transform_1(%arg0: i32) -> (i32, i32) {
    %c0_i32 = arith.constant 0 : i32
    %c0_i32_0 = arith.constant 0 : i32
    %c0_i32_1 = arith.constant 0 : i32
    return %c0_i32, %c0_i32_0 : i32, i32
  }
  func.func @transform_2(%arg0: i32) -> (i32, i32) {
    %c0_i32 = arith.constant 0 : i32
    %c0_i32_0 = arith.constant 0 : i32
    %c0_i32_1 = arith.constant 0 : i32
    return %c0_i32, %c0_i32_0 : i32, i32
  }
  func.func @transform_3(%arg0: i32) -> (i32, i32) {
    %c0_i32 = arith.constant 0 : i32
    %c0_i32_0 = arith.constant 0 : i32
    %c0_i32_1 = arith.constant 0 : i32
    return %c0_i32, %c0_i32_0 : i32, i32
  }
  func.func @transform_4(%arg0: i32) -> (i32, i32) {
    %c0_i32 = arith.constant 0 : i32
    %c0_i32_0 = arith.constant 0 : i32
    %c0_i32_1 = arith.constant 0 : i32
    return %c0_i32, %c0_i32_0 : i32, i32
  }
  func.func @transform_5(%arg0: i32) -> (i32, i32) {
    %c0_i32 = arith.constant 0 : i32
    %c0_i32_0 = arith.constant 0 : i32
    %c0_i32_1 = arith.constant 0 : i32
    return %c0_i32, %c0_i32_0 : i32, i32
  }
  func.func @transform_6(%arg0: i32) -> (i32, i32) {
    %c0_i32 = arith.constant 0 : i32
    %c0_i32_0 = arith.constant 0 : i32
    %c0_i32_1 = arith.constant 0 : i32
    return %c0_i32, %c0_i32_0 : i32, i32
  }
  func.func @transform_7(%arg0: i32) -> (i32, i32) {
    %c0_i32 = arith.constant 0 : i32
    %c0_i32_0 = arith.constant 0 : i32
    %c0_i32_1 = arith.constant 0 : i32
    return %c0_i32, %c0_i32_0 : i32, i32
  }
  func.func @transform_8(%arg0: i32) -> (i32, i32) {
    %c0_i32 = arith.constant 0 : i32
    %c0_i32_0 = arith.constant 0 : i32
    %c0_i32_1 = arith.constant 0 : i32
    return %c0_i32, %c0_i32_0 : i32, i32
  }
  func.func @transform_9(%arg0: i32) -> (i32, i32) {
    %c0_i32 = arith.constant 0 : i32
    %c0_i32_0 = arith.constant 0 : i32
    return %c0_i32, %arg0 : i32, i32
  }
}

</mosaic_0001>

<llo_original>
// kernel: value_approx_forward.1
$region0: #{value_approx_forward.1}
  #allocation0 [shape = 'u32[]', space=smem, size = 0x4, offset = 0x4, fixed_abs, tag = 'smem constant byte address 0x4 - core index']
  #allocation1 [shape = 'u32[144,128]{1,0:T(1,128)}', space=vmem, size = 0x12000, scoped, tag = 'internal scratch']
  #allocation2 [shape = 'f32[1,1]{1,0:T(1,128)S(1)}', space=vmem, size = 0x200, scoped, tag = 'scoped memory for value_approx_forward.1']
  %s0 = inlined_call_operand.vmem [shape: f32[512,8], index: 0, kind: input, shape index: {}]
  %s1 = inlined_call_operand.vmem [shape: f32[32,8], index: 1, kind: input, shape index: {}]
  %s2 = inlined_call_operand.vmem [shape: f32[32,1], index: 2, kind: input, shape index: {}]
  %s3 = inlined_call_operand.vmem [shape: f32[32,32], index: 3, kind: input, shape index: {}]
  %s4 = inlined_call_operand.vmem [shape: f32[32,1], index: 4, kind: input, shape index: {}]
  %s5 = inlined_call_operand.vmem [shape: f32[32,32], index: 5, kind: input, shape index: {}]
  %s6 = inlined_call_operand.vmem [shape: f32[32,1], index: 6, kind: input, shape index: {}]
  %s7 = inlined_call_operand.vmem [shape: f32[1,32], index: 7, kind: input, shape index: {}]
  %s8 = inlined_call_operand.<no memory space> [shape: f32[1,1], index: 8, kind: input, shape index: {}]
  %s9 = inlined_call_operand.hbm [shape: f32[1,512], index: 9, kind: output, shape index: {}]
  %s10 = sld [smem:[#allocation0]]
  $region69: #{value_approx_forward.1} parent=0
    _
  %s12 = ssub.s32 1, %s10
  %s13 = scalar_select 0, %s12, %s10
  %v14 = vstv %s8
  %15 = vst [vmem:[#allocation2] sm:$0x1] %v14
  $region1: #{value_approx_forward.1} parent=0
    #allocation3 [shape = 'u8[1024]{0}', space=vmem, size = 0x400, scoped, tag = 'output window, operand 0']
    #allocation4 [shape = 's32[2]{0}', space=sflag, size = 0x8, scoped, tag = 'scoped memory for value_approx_forward.1']
    %16 = vsyncpa [#allocation4], 0
    %s17 = scalar_lea.sflag [#allocation4], 1
    %18 = vsyncpa %s17, 0
    loop: start=0, step=1, limit=6
    $region2: #{value_approx_forward.1} parent=1 // loop_pre_header
      _
    $region3: #{value_approx_forward.1} parent=1 // loop_header
      %s20 = sphi 0, %s24
      %p21 = scmp.ge.s32.totalorder %s20, 6
      %s30 = sphi 0, %s32
      %s33 = sphi 0, %s30
      %s34 = sphi 0, %s33
      %s50 = sphi 0, %s34
      %s54 = sphi 0, %s54
      %s56 = sphi 0, %s54
      %s57 = sphi 0, %s56
      %s71 = sphi 0, %s57
      %s75 = sphi 0, %s75
      %s77 = sphi 0, %s75
      %s78 = sphi 0, %s77
      %s92 = sphi 0, %s78
      %s96 = sphi 0, %s96
      %s98 = sphi 0, %s96
      %s99 = sphi 0, %s98
      %s113 = sphi 0, %s99
      %s117 = sphi 0, %s117
      %s119 = sphi 0, %s117
      %s120 = sphi 0, %s119
      %s134 = sphi 0, %s120
      %s138 = sphi 0, %s138
      %s140 = sphi 0, %s138
      %s141 = sphi 0, %s140
      %s155 = sphi 0, %s141
      %s159 = sphi 0, %s159
      %s161 = sphi 0, %s159
      %s162 = sphi 0, %s161
      %s176 = sphi 0, %s162
      %s180 = sphi 0, %s180
      %s182 = sphi 0, %s180
      %s183 = sphi 0, %s182
      %s197 = sphi 0, %s183
      %s201 = sphi 0, %s201
      %s203 = sphi 0, %s201
      %s204 = sphi 0, %s203
      %s218 = sphi 0, %s204
      %s224 = sphi 0, %s226
      %s227 = sphi 0, %s224
      %s228 = sphi 0, %s227
      %s244 = sphi 0, %s228
    $region4: #{value_approx_forward.1} parent=1 // loop_header_branch
      %23 = sbr.rel (%p21) target = $region8
    $region5: #{value_approx_forward.1} parent=1 // loop_body
      %s25 = ssub.s32 %s20, 1
      %s26 = ssub.s32 %s20, 2
      %s27 = sadd.s32 %s20, 1
      %s28 = ssub.s32 %s20, %s27
      %p29 = scmp.eq.s32.totalorder %s28, 0
      %s31 = sadd.s32 %s30, 1
      %s32 = scalar_select %p29, %s30, %s31
      %p35 = pneg %p29
      %p36 = scmp.eq.s32.totalorder %s20, 3
      %p37 = por %p35, %p36
      %p38 = scmp.ne.s32.totalorder %s30, %s33
      %p39 = scmp.eq.s32.totalorder %s20, 0
      %p40 = por %p38, %p39
      %p41 = scmp.ne.s32.totalorder %s30, %s33
      %p42 = scmp.eq.s32.totalorder %s25, 3
      %p43 = por %p41, %p42
      %p44 = scmp.ne.s32.totalorder %s33, %s34
      %p45 = scmp.eq.s32.totalorder %s25, 0
      %p46 = por %p44, %p45
      %p47 = scmp.ne.s32.totalorder %s33, %s34
      %p48 = scmp.eq.s32.totalorder %s26, 3
      %p49 = por %p47, %p48
      %p51 = scmp.ne.s32.totalorder %s34, %s50
      %p52 = scmp.eq.s32.totalorder %s26, 0
      %p53 = por %p51, %p52
      %s55 = sadd.s32 %s54, 1
      %p58 = scmp.eq.s32.totalorder %s20, 3
      %p59 = scmp.ne.s32.totalorder %s54, %s56
      %p60 = scmp.eq.s32.totalorder %s20, 0
      %p61 = por %p59, %p60
      %p62 = scmp.ne.s32.totalorder %s54, %s56
      %p63 = scmp.eq.s32.totalorder %s25, 3
      %p64 = por %p62, %p63
      %p65 = scmp.ne.s32.totalorder %s56, %s57
      %p66 = scmp.eq.s32.totalorder %s25, 0
      %p67 = por %p65, %p66
      %p68 = scmp.ne.s32.totalorder %s56, %s57
      %p69 = scmp.eq.s32.totalorder %s26, 3
      %p70 = por %p68, %p69
      %p72 = scmp.ne.s32.totalorder %s57, %s71
      %p73 = scmp.eq.s32.totalorder %s26, 0
      %p74 = por %p72, %p73
      %s76 = sadd.s32 %s75, 1
      %p79 = scmp.eq.s32.totalorder %s20, 3
      %p80 = scmp.ne.s32.totalorder %s75, %s77
      %p81 = scmp.eq.s32.totalorder %s20, 0
      %p82 = por %p80, %p81
      %p83 = scmp.ne.s32.totalorder %s75, %s77
      %p84 = scmp.eq.s32.totalorder %s25, 3
      %p85 = por %p83, %p84
      %p86 = scmp.ne.s32.totalorder %s77, %s78
      %p87 = scmp.eq.s32.totalorder %s25, 0
      %p88 = por %p86, %p87
      %p89 = scmp.ne.s32.totalorder %s77, %s78
      %p90 = scmp.eq.s32.totalorder %s26, 3
      %p91 = por %p89, %p90
      %p93 = scmp.ne.s32.totalorder %s78, %s92
      %p94 = scmp.eq.s32.totalorder %s26, 0
      %p95 = por %p93, %p94
      %s97 = sadd.s32 %s96, 1
      %p100 = scmp.eq.s32.totalorder %s20, 3
      %p101 = scmp.ne.s32.totalorder %s96, %s98
      %p102 = scmp.eq.s32.totalorder %s20, 0
      %p103 = por %p101, %p102
      %p104 = scmp.ne.s32.totalorder %s96, %s98
      %p105 = scmp.eq.s32.totalorder %s25, 3
      %p106 = por %p104, %p105
      %p107 = scmp.ne.s32.totalorder %s98, %s99
      %p108 = scmp.eq.s32.totalorder %s25, 0
      %p109 = por %p107, %p108
      %p110 = scmp.ne.s32.totalorder %s98, %s99
      %p111 = scmp.eq.s32.totalorder %s26, 3
      %p112 = por %p110, %p111
      %p114 = scmp.ne.s32.totalorder %s99, %s113
      %p115 = scmp.eq.s32.totalorder %s26, 0
      %p116 = por %p114, %p115
      %s118 = sadd.s32 %s117, 1
      %p121 = scmp.eq.s32.totalorder %s20, 3
      %p122 = scmp.ne.s32.totalorder %s117, %s119
      %p123 = scmp.eq.s32.totalorder %s20, 0
      %p124 = por %p122, %p123
      %p125 = scmp.ne.s32.totalorder %s117, %s119
      %p126 = scmp.eq.s32.totalorder %s25, 3
      %p127 = por %p125, %p126
      %p128 = scmp.ne.s32.totalorder %s119, %s120
      %p129 = scmp.eq.s32.totalorder %s25, 0
      %p130 = por %p128, %p129
      %p131 = scmp.ne.s32.totalorder %s119, %s120
      %p132 = scmp.eq.s32.totalorder %s26, 3
      %p133 = por %p131, %p132
      %p135 = scmp.ne.s32.totalorder %s120, %s134
      %p136 = scmp.eq.s32.totalorder %s26, 0
      %p137 = por %p135, %p136
      %s139 = sadd.s32 %s138, 1
      %p142 = scmp.eq.s32.totalorder %s20, 3
      %p143 = scmp.ne.s32.totalorder %s138, %s140
      %p144 = scmp.eq.s32.totalorder %s20, 0
      %p145 = por %p143, %p144
      %p146 = scmp.ne.s32.totalorder %s138, %s140
      %p147 = scmp.eq.s32.totalorder %s25, 3
      %p148 = por %p146, %p147
      %p149 = scmp.ne.s32.totalorder %s140, %s141
      %p150 = scmp.eq.s32.totalorder %s25, 0
      %p151 = por %p149, %p150
      %p152 = scmp.ne.s32.totalorder %s140, %s141
      %p153 = scmp.eq.s32.totalorder %s26, 3
      %p154 = por %p152, %p153
      %p156 = scmp.ne.s32.totalorder %s141, %s155
      %p157 = scmp.eq.s32.totalorder %s26, 0
      %p158 = por %p156, %p157
      %s160 = sadd.s32 %s159, 1
      %p163 = scmp.eq.s32.totalorder %s20, 3
      %p164 = scmp.ne.s32.totalorder %s159, %s161
      %p165 = scmp.eq.s32.totalorder %s20, 0
      %p166 = por %p164, %p165
      %p167 = scmp.ne.s32.totalorder %s159, %s161
      %p168 = scmp.eq.s32.totalorder %s25, 3
      %p169 = por %p167, %p168
      %p170 = scmp.ne.s32.totalorder %s161, %s162
      %p171 = scmp.eq.s32.totalorder %s25, 0
      %p172 = por %p170, %p171
      %p173 = scmp.ne.s32.totalorder %s161, %s162
      %p174 = scmp.eq.s32.totalorder %s26, 3
      %p175 = por %p173, %p174
      %p177 = scmp.ne.s32.totalorder %s162, %s176
      %p178 = scmp.eq.s32.totalorder %s26, 0
      %p179 = por %p177, %p178
      %s181 = sadd.s32 %s180, 1
      %p184 = scmp.eq.s32.totalorder %s20, 3
      %p185 = scmp.ne.s32.totalorder %s180, %s182
      %p186 = scmp.eq.s32.totalorder %s20, 0
      %p187 = por %p185, %p186
      %p188 = scmp.ne.s32.totalorder %s180, %s182
      %p189 = scmp.eq.s32.totalorder %s25, 3
      %p190 = por %p188, %p189
      %p191 = scmp.ne.s32.totalorder %s182, %s183
      %p192 = scmp.eq.s32.totalorder %s25, 0
      %p193 = por %p191, %p192
      %p194 = scmp.ne.s32.totalorder %s182, %s183
      %p195 = scmp.eq.s32.totalorder %s26, 3
      %p196 = por %p194, %p195
      %p198 = scmp.ne.s32.totalorder %s183, %s197
      %p199 = scmp.eq.s32.totalorder %s26, 0
      %p200 = por %p198, %p199
      %s202 = sadd.s32 %s201, 1
      %p205 = scmp.eq.s32.totalorder %s20, 3
      %p206 = scmp.ne.s32.totalorder %s201, %s203
      %p207 = scmp.eq.s32.totalorder %s20, 0
      %p208 = por %p206, %p207
      %p209 = scmp.ne.s32.totalorder %s201, %s203
      %p210 = scmp.eq.s32.totalorder %s25, 3
      %p211 = por %p209, %p210
      %p212 = scmp.ne.s32.totalorder %s203, %s204
      %p213 = scmp.eq.s32.totalorder %s25, 0
      %p214 = por %p212, %p213
      %p215 = scmp.ne.s32.totalorder %s203, %s204
      %p216 = scmp.eq.s32.totalorder %s26, 3
      %p217 = por %p215, %p216
      %p219 = scmp.ne.s32.totalorder %s204, %s218
      %p220 = scmp.eq.s32.totalorder %s26, 0
      %p221 = por %p219, %p220
      %s222 = ssub.s32 %s20, %s27
      %p223 = scmp.eq.s32.totalorder %s222, 0
      %s225 = sadd.s32 %s224, 1
      %s226 = scalar_select %p223, %s224, %s225
      %p229 = pneg %p223
      %p230 = scmp.eq.s32.totalorder %s20, 3
      %p231 = por %p229, %p230
      %p232 = scmp.ne.s32.totalorder %s224, %s227
      %p233 = scmp.eq.s32.totalorder %s20, 0
      %p234 = por %p232, %p233
      %p235 = scmp.ne.s32.totalorder %s224, %s227
      %p236 = scmp.eq.s32.totalorder %s25, 3
      %p237 = por %p235, %p236
      %p238 = scmp.ne.s32.totalorder %s227, %s228
      %p239 = scmp.eq.s32.totalorder %s25, 0
      %p240 = por %p238, %p239
      %p241 = scmp.ne.s32.totalorder %s227, %s228
      %p242 = scmp.eq.s32.totalorder %s26, 3
      %p243 = por %p241, %p242
      %p245 = scmp.ne.s32.totalorder %s228, %s244
      %p246 = scmp.eq.s32.totalorder %s26, 0
      %p247 = por %p245, %p246
      %p248 = scmp.le.s32.totalorder 1, %s20
      %p249 = scmp.lt.s32.totalorder %s20, 5
      %p250 = pnand %p248, %p249
      %p251 = pneg %p250
      // Predicated region
      $region9: #{value_approx_forward.1} parent=5 // pred_check
        _
      $region10: #{value_approx_forward.1} parent=5 // pred_check_branch
        %253 = sbr.rel (%p250) target = $region12
      $region11: #{value_approx_forward.1} parent=5 // pred_region
        %s254 = ssub.s32 %s20, 1
        // Predicated region
        $region13: #{value_approx_forward.1} parent=11 // pred_check
          %p255 = pneg %p67
        $region14: #{value_approx_forward.1} parent=11 // pred_check_branch
          %257 = sbr.rel (%p255) target = $region16
        $region15: #{value_approx_forward.1} parent=11 // pred_region
          _
        $region16: #{value_approx_forward.1} parent=11 // pred_fallthru
          _
        // Predicated region
        $region17: #{value_approx_forward.1} parent=11 // pred_check
          %p258 = pneg %p88
        $region18: #{value_approx_forward.1} parent=11 // pred_check_branch
          %260 = sbr.rel (%p258) target = $region20
        $region19: #{value_approx_forward.1} parent=11 // pred_region
          _
        $region20: #{value_approx_forward.1} parent=11 // pred_fallthru
          _
        // Predicated region
        $region21: #{value_approx_forward.1} parent=11 // pred_check
          %p261 = pneg %p109
        $region22: #{value_approx_forward.1} parent=11 // pred_check_branch
          %263 = sbr.rel (%p261) target = $region24
        $region23: #{value_approx_forward.1} parent=11 // pred_region
          _
        $region24: #{value_approx_forward.1} parent=11 // pred_fallthru
          _
        // Predicated region
        $region25: #{value_approx_forward.1} parent=11 // pred_check
          %p264 = pneg %p130
        $region26: #{value_approx_forward.1} parent=11 // pred_check_branch
          %266 = sbr.rel (%p264) target = $region28
        $region27: #{value_approx_forward.1} parent=11 // pred_region
          _
        $region28: #{value_approx_forward.1} parent=11 // pred_fallthru
          _
        // Predicated region
        $region29: #{value_approx_forward.1} parent=11 // pred_check
          %p267 = pneg %p151
        $region30: #{value_approx_forward.1} parent=11 // pred_check_branch
          %269 = sbr.rel (%p267) target = $region32
        $region31: #{value_approx_forward.1} parent=11 // pred_region
          _
        $region32: #{value_approx_forward.1} parent=11 // pred_fallthru
          _
        // Predicated region
        $region33: #{value_approx_forward.1} parent=11 // pred_check
          %p270 = pneg %p172
        $region34: #{value_approx_forward.1} parent=11 // pred_check_branch
          %272 = sbr.rel (%p270) target = $region36
        $region35: #{value_approx_forward.1} parent=11 // pred_region
          _
        $region36: #{value_approx_forward.1} parent=11 // pred_fallthru
          _
        // Predicated region
        $region37: #{value_approx_forward.1} parent=11 // pred_check
          %p273 = pneg %p193
        $region38: #{value_approx_forward.1} parent=11 // pred_check_branch
          %275 = sbr.rel (%p273) target = $region40
        $region39: #{value_approx_forward.1} parent=11 // pred_region
          _
        $region40: #{value_approx_forward.1} parent=11 // pred_fallthru
          _
        // Predicated region
        $region41: #{value_approx_forward.1} parent=11 // pred_check
          %p276 = pneg %p214
        $region42: #{value_approx_forward.1} parent=11 // pred_check_branch
          %278 = sbr.rel (%p276) target = $region44
        $region43: #{value_approx_forward.1} parent=11 // pred_region
          _
        $region44: #{value_approx_forward.1} parent=11 // pred_fallthru
          _
      $region12: #{value_approx_forward.1} parent=5 // pred_fallthru
        _
      %p279 = scmp.lt.s32.totalorder %s20, 4
      // Predicated region
      $region45: #{value_approx_forward.1} parent=5 // pred_check
        %p280 = pneg %p279
      $region46: #{value_approx_forward.1} parent=5 // pred_check_branch
        %282 = sbr.rel (%p280) target = $region48
      $region47: #{value_approx_forward.1} parent=5 // pred_region
        // Predicated region
        $region49: #{value_approx_forward.1} parent=47 // pred_check
          %p283 = pneg %p40
        $region50: #{value_approx_forward.1} parent=47 // pred_check_branch
          %285 = sbr.rel (%p283) target = $region52
        $region51: #{value_approx_forward.1} parent=47 // pred_region
          %s286 = smul.u32 16, %s20
          %p287 = scmp.lt.s32.totalorder %s286, 63
          %s288 = scalar_select %p287, %s286, 63
          %s289 = smul.addr %s288, 8
          %s290 = scalar_lea.vmem %s0, %s289
          %s291 = smul.u32 16, %s20
        $region52: #{value_approx_forward.1} parent=47 // pred_fallthru
          _
      $region48: #{value_approx_forward.1} parent=5 // pred_fallthru
        _
      %p292 = scmp.le.s32.totalorder 1, %s20
      %p293 = scmp.lt.s32.totalorder %s20, 5
      %p294 = pnand %p292, %p293
      %p295 = pneg %p294
      // Predicated region
      $region53: #{value_approx_forward.1} parent=5 // pred_check
        _
      $region54: #{value_approx_forward.1} parent=5 // pred_check_branch
        %297 = sbr.rel (%p294) target = $region56
      $region55: #{value_approx_forward.1} parent=5 // pred_region
        %s298 = ssub.s32 %s20, 1
        %s299 = smul.u32 16, %s25
        %p300 = scmp.lt.s32.totalorder %s299, 63
        %s301 = scalar_select %p300, %s299, 63
        %s302 = smul.addr %s301, 8
        %s303 = scalar_lea.vmem %s0, %s302
        %p304 = pneg %p46
        %p305 = pneg %p43
        %p306 = pneg %p67
        %p307 = pneg %p64
        %p308 = pneg %p88
        %p309 = pneg %p85
        %p310 = pneg %p109
        %p311 = pneg %p106
        %p312 = pneg %p130
        %p313 = pneg %p127
        %p314 = pneg %p151
        %p315 = pneg %p148
        %p316 = pneg %p172
        %p317 = pneg %p169
        %p318 = pneg %p193
        %p319 = pneg %p190
        %p320 = pneg %p214
        %p321 = pneg %p211
        %p322 = pneg %p240
        %p323 = pneg %p237
        %s324 = sand.u32 %s227, 1
        %s325 = scalar_lea.sflag [#allocation4], %s324
        %s326 = sand.u32 %s227, 1
        %s327 = scalar_lea.vmem [#allocation3], %s326
        %s328 = smul.u32 16, %s25
        %p329 = scmp.lt.s32.totalorder %s328, 63
        %s330 = scalar_select %p329, %s328, 63
        %s331 = smul.addr %s330, 8
        %s332 = scalar_lea.vmem %s0, %s331
        %s333 = smul.u32 16, %s25
        %v334 = vld [vmem:[%s332] sm:$0xff]
        %v335 = vld [vmem:[%s332 + $0x8] sm:$0xff]
        %v336 = vld [vmem:[%s332 + $0x10] sm:$0xff]
        %v337 = vld [vmem:[%s332 + $0x18] sm:$0xff]
        %v338 = vld [vmem:[%s332 + $0x20] sm:$0xff]
        %v339 = vld [vmem:[%s332 + $0x28] sm:$0xff]
        %v340 = vld [vmem:[%s332 + $0x30] sm:$0xff]
        %v341 = vld [vmem:[%s332 + $0x38] sm:$0xff]
        %v342 = vld [vmem:[%s332 + $0x40] sm:$0xff]
        %v343 = vld [vmem:[%s332 + $0x48] sm:$0xff]
        %v344 = vld [vmem:[%s332 + $0x50] sm:$0xff]
        %v345 = vld [vmem:[%s332 + $0x58] sm:$0xff]
        %v346 = vld [vmem:[%s332 + $0x60] sm:$0xff]
        %v347 = vld [vmem:[%s332 + $0x68] sm:$0xff]
        %v348 = vld [vmem:[%s332 + $0x70] sm:$0xff]
        %v349 = vld [vmem:[%s332 + $0x78] sm:$0xff]
        %v350 = vld [vmem:[%s1] sm:$0xff]
        %v351 = vld [vmem:[%s1 + $0x8] sm:$0xff]
        %v352 = vld [vmem:[%s1 + $0x10] sm:$0xff]
        %v353 = vld [vmem:[%s1 + $0x18] sm:$0xff]
        %v354 = vld [vmem:[%s2] sm:$0xff]
        %v355 = vld [vmem:[%s2 + $0x8] sm:$0xff]
        %v356 = vld [vmem:[%s2 + $0x10] sm:$0xff]
        %v357 = vld [vmem:[%s2 + $0x18] sm:$0xff]
        %359 = vset.pattern.permute.xlu0 0
        %360 = vperm.xlu0 %359, %v354
        %v361 = vpop.permute.xlu0 %360
        %364 = vset.pattern.permute.xlu0 0
        %365 = vperm.xlu0 %364, %v355
        %v366 = vpop.permute.xlu0 %365
        %369 = vset.pattern.permute.xlu0 0
        %370 = vperm.xlu0 %369, %v356
        %v371 = vpop.permute.xlu0 %370
        %374 = vset.pattern.permute.xlu0 0
        %375 = vperm.xlu0 %374, %v357
        %v376 = vpop.permute.xlu0 %375
        %vm378 = vcmask 64512
        %v380 = vsel %vm378, %v350, 0
        %v383 = vsel %vm378, %v351, 0
        %v386 = vsel %vm378, %v352, 0
        %v389 = vsel %vm378, %v353, 0
        %v392 = vsel %vm378, %v334, 0
        %v395 = vsel %vm378, %v335, 0
        %v398 = vsel %vm378, %v336, 0
        %v401 = vsel %vm378, %v337, 0
        %v404 = vsel %vm378, %v338, 0
        %v407 = vsel %vm378, %v339, 0
        %v410 = vsel %vm378, %v340, 0
        %v413 = vsel %vm378, %v341, 0
        %v416 = vsel %vm378, %v342, 0
        %v419 = vsel %vm378, %v343, 0
        %v422 = vsel %vm378, %v344, 0
        %v425 = vsel %vm378, %v345, 0
        %v428 = vsel %vm378, %v346, 0
        %v431 = vsel %vm378, %v347, 0
        %v434 = vsel %vm378, %v348, 0
        %v437 = vsel %vm378, %v349, 0
        %439 = vmatprep.subr.mxu0 0.0
        %440 = vmatpush1.xpose.msra.mxu0 %v392
        %441 = vmatprep.subr.mxu0 0.0
        %442 = vmatpush1.xpose.msra.mxu0 %v395
        %443 = vmatprep.subr.mxu0 0.0
        %444 = vmatpush1.xpose.msra.mxu0 %v398
        %445 = vmatprep.subr.mxu0 0.0
        %446 = vmatpush1.xpose.msra.mxu0 %v401
        %447 = vmatprep.subr.mxu0 0.0
        %448 = vmatpush1.xpose.msra.mxu0 %v404
        %449 = vmatprep.subr.mxu0 0.0
        %450 = vmatpush1.xpose.msra.mxu0 %v407
        %451 = vmatprep.subr.mxu0 0.0
        %452 = vmatpush1.xpose.msra.mxu0 %v410
        %453 = vmatprep.subr.mxu0 0.0
        %454 = vmatpush1.xpose.msra.mxu0 %v413
        %455 = vmatprep.subr.mxu0 0.0
        %456 = vmatpush1.xpose.msra.mxu0 %v416
        %457 = vmatprep.subr.mxu0 0.0
        %458 = vmatpush1.xpose.msra.mxu0 %v419
        %459 = vmatprep.subr.mxu0 0.0
        %460 = vmatpush1.xpose.msra.mxu0 %v422
        %461 = vmatprep.subr.mxu0 0.0
        %462 = vmatpush1.xpose.msra.mxu0 %v425
        %463 = vmatprep.subr.mxu0 0.0
        %464 = vmatpush1.xpose.msra.mxu0 %v428
        %465 = vmatprep.subr.mxu0 0.0
        %466 = vmatpush1.xpose.msra.mxu0 %v431
        %467 = vmatprep.subr.mxu0 0.0
        %468 = vmatpush1.xpose.msra.mxu0 %v434
        %469 = vmatprep.subr.mxu0 0.0
        %470 = vmatpush1.xpose.msra.mxu0 %v437
        %471 = vmatprep.subr.mxu0 0.0
        %472 = vmatpush1.xpose.msra.mxu0 0.0
        %473 = vmatprep.subr.mxu0 0.0
        %474 = vmatpush1.xpose.msra.mxu0 0.0
        %475 = vmatprep.subr.mxu0 0.0
        %476 = vmatpush1.xpose.msra.mxu0 0.0
        %477 = vmatprep.subr.mxu0 0.0
        %478 = vmatpush1.xpose.msra.mxu0 0.0
        %479 = vmatprep.subr.mxu0 0.0
        %480 = vmatpush1.xpose.msra.mxu0 0.0
        %481 = vmatprep.subr.mxu0 0.0
        %482 = vmatpush1.xpose.msra.mxu0 0.0
        %483 = vmatprep.subr.mxu0 0.0
        %484 = vmatpush1.xpose.msra.mxu0 0.0
        %485 = vmatprep.subr.mxu0 0.0
        %486 = vmatpush1.xpose.msra.mxu0 0.0
        %487 = vmatprep.subr.mxu0 0.0
        %488 = vmatpush1.xpose.msra.mxu0 0.0
        %489 = vmatprep.subr.mxu0 0.0
        %490 = vmatpush1.xpose.msra.mxu0 0.0
        %491 = vmatprep.subr.mxu0 0.0
        %492 = vmatpush1.xpose.msra.mxu0 0.0
        %493 = vmatprep.subr.mxu0 0.0
        %494 = vmatpush1.xpose.msra.mxu0 0.0
        %495 = vmatprep.subr.mxu0 0.0
        %496 = vmatpush1.xpose.msra.mxu0 0.0
        %497 = vmatprep.subr.mxu0 0.0
        %498 = vmatpush1.xpose.msra.mxu0 0.0
        %499 = vmatprep.subr.mxu0 0.0
        %500 = vmatpush1.xpose.msra.mxu0 0.0
        %501 = vmatprep.subr.mxu0 0.0
        %502 = vmatpush1.xpose.msra.mxu0 0.0
        %503 = vmatprep.mubr.f32.mxu0 0.0
        %504 = vmatmul.mubr.f32.gmra.mrb[0].mxu0 %v380
        %v505 = vpop.f32.mrb[0].mxu0
        %v506 = vadd.f32 %v361, %v505
        %v507 = vpop.f32.mrb[0].mxu0
        %508 = vmatprep.mubr.f32.mxu0 0.0
        %509 = vmatmul.mubr.f32.gmra.mrb[0].mxu0 %v383
        %v510 = vpop.f32.mrb[0].mxu0
        %v511 = vadd.f32 %v366, %v510
        %v512 = vpop.f32.mrb[0].mxu0
        %513 = vmatprep.mubr.f32.mxu0 0.0
        %514 = vmatmul.mubr.f32.gmra.mrb[0].mxu0 %v386
        %v515 = vpop.f32.mrb[0].mxu0
        %v516 = vadd.f32 %v371, %v515
        %v517 = vpop.f32.mrb[0].mxu0
        %518 = vmatprep.mubr.f32.mxu0 0.0
        %519 = vmatmul.mubr.f32.gmra.mrb[0].mxu0 %v389
        %v520 = vpop.f32.mrb[0].mxu0
        %v521 = vadd.f32 %v376, %v520
        %v522 = vpop.f32.mrb[0].mxu0
        %523 = vdwg.mxu0
        %v524 = vmax.f32 %v506, 0.0
        %v525 = vmax.f32 %v511, 0.0
        %v526 = vmax.f32 %v516, 0.0
        %v527 = vmax.f32 %v521, 0.0
        %v528 = vld [vmem:[%s3] sm:$0xff]
        %v529 = vld [vmem:[%s3 + $0x8] sm:$0xff]
        %v530 = vld [vmem:[%s3 + $0x10] sm:$0xff]
        %v531 = vld [vmem:[%s3 + $0x18] sm:$0xff]
        %v532 = vld [vmem:[%s4] sm:$0xff]
        %v533 = vld [vmem:[%s4 + $0x8] sm:$0xff]
        %v534 = vld [vmem:[%s4 + $0x10] sm:$0xff]
        %v535 = vld [vmem:[%s4 + $0x18] sm:$0xff]
        %537 = vset.pattern.permute.xlu0 0
        %538 = vperm.xlu0 %537, %v532
        %v539 = vpop.permute.xlu0 %538
        %542 = vset.pattern.permute.xlu0 0
        %543 = vperm.xlu0 %542, %v533
        %v544 = vpop.permute.xlu0 %543
        %547 = vset.pattern.permute.xlu0 0
        %548 = vperm.xlu0 %547, %v534
        %v549 = vpop.permute.xlu0 %548
        %552 = vset.pattern.permute.xlu0 0
        %553 = vperm.xlu0 %552, %v535
        %v554 = vpop.permute.xlu0 %553
        %vm556 = vcmask 261120
        %v558 = vsel %vm556, %v528, 0
        %v561 = vsel %vm556, %v529, 0
        %v564 = vsel %vm556, %v530, 0
        %v567 = vsel %vm556, %v531, 0
        %569 = vmatprep.subr.mxu0 0.0
        %570 = vmatpush1.msra.mxu0 %v524
        %571 = vmatprep.subr.mxu0 0.0
        %572 = vmatpush1.msra.mxu0 %v525
        %573 = vmatprep.subr.mxu0 0.0
        %574 = vmatpush1.msra.mxu0 %v526
        %575 = vmatprep.subr.mxu0 0.0
        %576 = vmatpush1.msra.mxu0 %v527
        %577 = vmatprep.subr.mxu0 0.0
        %578 = vmatpush1.msra.mxu0 0.0
        %579 = vmatprep.subr.mxu0 0.0
        %580 = vmatpush1.msra.mxu0 0.0
        %581 = vmatprep.subr.mxu0 0.0
        %582 = vmatpush1.msra.mxu0 0.0
        %583 = vmatprep.subr.mxu0 0.0
        %584 = vmatpush1.msra.mxu0 0.0
        %585 = vmatprep.subr.mxu0 0.0
        %586 = vmatpush1.msra.mxu0 0.0
        %587 = vmatprep.subr.mxu0 0.0
        %588 = vmatpush1.msra.mxu0 0.0
        %589 = vmatprep.subr.mxu0 0.0
        %590 = vmatpush1.msra.mxu0 0.0
        %591 = vmatprep.subr.mxu0 0.0
        %592 = vmatpush1.msra.mxu0 0.0
        %593 = vmatprep.subr.mxu0 0.0
        %594 = vmatpush1.msra.mxu0 0.0
        %595 = vmatprep.subr.mxu0 0.0
        %596 = vmatpush1.msra.mxu0 0.0
        %597 = vmatprep.subr.mxu0 0.0
        %598 = vmatpush1.msra.mxu0 0.0
        %599 = vmatprep.subr.mxu0 0.0
        %600 = vmatpush1.msra.mxu0 0.0
        %601 = vmatprep.subr.mxu0 0.0
        %602 = vmatpush1.msra.mxu0 0.0
        %603 = vmatprep.subr.mxu0 0.0
        %604 = vmatpush1.msra.mxu0 0.0
        %605 = vmatprep.subr.mxu0 0.0
        %606 = vmatpush1.msra.mxu0 0.0
        %607 = vmatprep.subr.mxu0 0.0
        %608 = vmatpush1.msra.mxu0 0.0
        %609 = vmatprep.subr.mxu0 0.0
        %610 = vmatpush1.msra.mxu0 0.0
        %611 = vmatprep.subr.mxu0 0.0
        %612 = vmatpush1.msra.mxu0 0.0
        %613 = vmatprep.subr.mxu0 0.0
        %614 = vmatpush1.msra.mxu0 0.0
        %615 = vmatprep.subr.mxu0 0.0
        %616 = vmatpush1.msra.mxu0 0.0
        %617 = vmatprep.subr.mxu0 0.0
        %618 = vmatpush1.msra.mxu0 0.0
        %619 = vmatprep.subr.mxu0 0.0
        %620 = vmatpush1.msra.mxu0 0.0
        %621 = vmatprep.subr.mxu0 0.0
        %622 = vmatpush1.msra.mxu0 0.0
        %623 = vmatprep.subr.mxu0 0.0
        %624 = vmatpush1.msra.mxu0 0.0
        %625 = vmatprep.subr.mxu0 0.0
        %626 = vmatpush1.msra.mxu0 0.0
        %627 = vmatprep.subr.mxu0 0.0
        %628 = vmatpush1.msra.mxu0 0.0
        %629 = vmatprep.subr.mxu0 0.0
        %630 = vmatpush1.msra.mxu0 0.0
        %631 = vmatprep.subr.mxu0 0.0
        %632 = vmatpush1.msra.mxu0 0.0
        %633 = vmatprep.mubr.f32.mxu0 0.0
        %634 = vmatmul.mubr.f32.gmra.mrb[0].mxu0 %v558
        %v635 = vpop.f32.mrb[0].mxu0
        %v636 = vadd.f32 %v539, %v635
        %v637 = vpop.f32.mrb[0].mxu0
        %638 = vmatprep.mubr.f32.mxu0 0.0
        %639 = vmatmul.mubr.f32.gmra.mrb[0].mxu0 %v561
        %v640 = vpop.f32.mrb[0].mxu0
        %v641 = vadd.f32 %v544, %v640
        %v642 = vpop.f32.mrb[0].mxu0
        %643 = vmatprep.mubr.f32.mxu0 0.0
        %644 = vmatmul.mubr.f32.gmra.mrb[0].mxu0 %v564
        %v645 = vpop.f32.mrb[0].mxu0
        %v646 = vadd.f32 %v549, %v645
        %v647 = vpop.f32.mrb[0].mxu0
        %648 = vmatprep.mubr.f32.mxu0 0.0
        %649 = vmatmul.mubr.f32.gmra.mrb[0].mxu0 %v567
        %v650 = vpop.f32.mrb[0].mxu0
        %v651 = vadd.f32 %v554, %v650
        %v652 = vpop.f32.mrb[0].mxu0
        %653 = vdwg.mxu0
        %v654 = vmax.f32 %v636, 0.0
        %v655 = vmax.f32 %v641, 0.0
        %v656 = vmax.f32 %v646, 0.0
        %v657 = vmax.f32 %v651, 0.0
        %v658 = vld [vmem:[%s5] sm:$0xff]
        %v659 = vld [vmem:[%s5 + $0x8] sm:$0xff]
        %v660 = vld [vmem:[%s5 + $0x10] sm:$0xff]
        %v661 = vld [vmem:[%s5 + $0x18] sm:$0xff]
        %v662 = vld [vmem:[%s6] sm:$0xff]
        %v663 = vld [vmem:[%s6 + $0x8] sm:$0xff]
        %v664 = vld [vmem:[%s6 + $0x10] sm:$0xff]
        %v665 = vld [vmem:[%s6 + $0x18] sm:$0xff]
        %667 = vset.pattern.permute.xlu0 0
        %668 = vperm.xlu0 %667, %v662
        %v669 = vpop.permute.xlu0 %668
        %672 = vset.pattern.permute.xlu0 0
        %673 = vperm.xlu0 %672, %v663
        %v674 = vpop.permute.xlu0 %673
        %677 = vset.pattern.permute.xlu0 0
        %678 = vperm.xlu0 %677, %v664
        %v679 = vpop.permute.xlu0 %678
        %682 = vset.pattern.permute.xlu0 0
        %683 = vperm.xlu0 %682, %v665
        %v684 = vpop.permute.xlu0 %683
        %v687 = vsel %vm556, %v658, 0
        %v690 = vsel %vm556, %v659, 0
        %v693 = vsel %vm556, %v660, 0
        %v696 = vsel %vm556, %v661, 0
        %698 = vmatprep.subr.mxu0 0.0
        %699 = vmatpush1.msra.mxu0 %v654
        %700 = vmatprep.subr.mxu0 0.0
        %701 = vmatpush1.msra.mxu0 %v655
        %702 = vmatprep.subr.mxu0 0.0
        %703 = vmatpush1.msra.mxu0 %v656
        %704 = vmatprep.subr.mxu0 0.0
        %705 = vmatpush1.msra.mxu0 %v657
        %706 = vmatprep.subr.mxu0 0.0
        %707 = vmatpush1.msra.mxu0 0.0
        %708 = vmatprep.subr.mxu0 0.0
        %709 = vmatpush1.msra.mxu0 0.0
        %710 = vmatprep.subr.mxu0 0.0
        %711 = vmatpush1.msra.mxu0 0.0
        %712 = vmatprep.subr.mxu0 0.0
        %713 = vmatpush1.msra.mxu0 0.0
        %714 = vmatprep.subr.mxu0 0.0
        %715 = vmatpush1.msra.mxu0 0.0
        %716 = vmatprep.subr.mxu0 0.0
        %717 = vmatpush1.msra.mxu0 0.0
        %718 = vmatprep.subr.mxu0 0.0
        %719 = vmatpush1.msra.mxu0 0.0
        %720 = vmatprep.subr.mxu0 0.0
        %721 = vmatpush1.msra.mxu0 0.0
        %722 = vmatprep.subr.mxu0 0.0
        %723 = vmatpush1.msra.mxu0 0.0
        %724 = vmatprep.subr.mxu0 0.0
        %725 = vmatpush1.msra.mxu0 0.0
        %726 = vmatprep.subr.mxu0 0.0
        %727 = vmatpush1.msra.mxu0 0.0
        %728 = vmatprep.subr.mxu0 0.0
        %729 = vmatpush1.msra.mxu0 0.0
        %730 = vmatprep.subr.mxu0 0.0
        %731 = vmatpush1.msra.mxu0 0.0
        %732 = vmatprep.subr.mxu0 0.0
        %733 = vmatpush1.msra.mxu0 0.0
        %734 = vmatprep.subr.mxu0 0.0
        %735 = vmatpush1.msra.mxu0 0.0
        %736 = vmatprep.subr.mxu0 0.0
        %737 = vmatpush1.msra.mxu0 0.0
        %738 = vmatprep.subr.mxu0 0.0
        %739 = vmatpush1.msra.mxu0 0.0
        %740 = vmatprep.subr.mxu0 0.0
        %741 = vmatpush1.msra.mxu0 0.0
        %742 = vmatprep.subr.mxu0 0.0
        %743 = vmatpush1.msra.mxu0 0.0
        %744 = vmatprep.subr.mxu0 0.0
        %745 = vmatpush1.msra.mxu0 0.0
        %746 = vmatprep.subr.mxu0 0.0
        %747 = vmatpush1.msra.mxu0 0.0
        %748 = vmatprep.subr.mxu0 0.0
        %749 = vmatpush1.msra.mxu0 0.0
        %750 = vmatprep.subr.mxu0 0.0
        %751 = vmatpush1.msra.mxu0 0.0
        %752 = vmatprep.subr.mxu0 0.0
        %753 = vmatpush1.msra.mxu0 0.0
        %754 = vmatprep.subr.mxu0 0.0
        %755 = vmatpush1.msra.mxu0 0.0
        %756 = vmatprep.subr.mxu0 0.0
        %757 = vmatpush1.msra.mxu0 0.0
        %758 = vmatprep.subr.mxu0 0.0
        %759 = vmatpush1.msra.mxu0 0.0
        %760 = vmatprep.subr.mxu0 0.0
        %761 = vmatpush1.msra.mxu0 0.0
        %762 = vmatprep.mubr.f32.mxu0 0.0
        %763 = vmatmul.mubr.f32.gmra.mrb[0].mxu0 %v687
        %v764 = vpop.f32.mrb[0].mxu0
        %v765 = vadd.f32 %v669, %v764
        %v766 = vpop.f32.mrb[0].mxu0
        %767 = vmatprep.mubr.f32.mxu0 0.0
        %768 = vmatmul.mubr.f32.gmra.mrb[0].mxu0 %v690
        %v769 = vpop.f32.mrb[0].mxu0
        %v770 = vadd.f32 %v674, %v769
        %v771 = vpop.f32.mrb[0].mxu0
        %772 = vmatprep.mubr.f32.mxu0 0.0
        %773 = vmatmul.mubr.f32.gmra.mrb[0].mxu0 %v693
        %v774 = vpop.f32.mrb[0].mxu0
        %v775 = vadd.f32 %v679, %v774
        %v776 = vpop.f32.mrb[0].mxu0
        %777 = vmatprep.mubr.f32.mxu0 0.0
        %778 = vmatmul.mubr.f32.gmra.mrb[0].mxu0 %v696
        %v779 = vpop.f32.mrb[0].mxu0
        %v780 = vadd.f32 %v684, %v779
        %v781 = vpop.f32.mrb[0].mxu0
        %782 = vdwg.mxu0
        %v783 = vmax.f32 %v765, 0.0
        %v784 = vmax.f32 %v770, 0.0
        %v785 = vmax.f32 %v775, 0.0
        %v786 = vmax.f32 %v780, 0.0
        %v787 = vld [vmem:[%s7] sm:$0x1]
        %v788 = vld [vmem:[#allocation2] sm:$0x1]
        %790 = vset.pattern.permute.xlu0 0
        %791 = vperm.xlu0 %790, %v788
        %v792 = vpop.permute.xlu0 %791
        %v794 = vlaneseq
        %v795 = vshrl.u32 %v794, 7
        %v796 = vsub.s32 0, %v795
        %v797 = vrot.slane %v792, %v796
        %v799 = vsel %vm556, %v787, 0
        %801 = vmatprep.subr.mxu0 0.0
        %802 = vmatpush1.msra.mxu0 %v783
        %803 = vmatprep.subr.mxu0 0.0
        %804 = vmatpush1.msra.mxu0 %v784
        %805 = vmatprep.subr.mxu0 0.0
        %806 = vmatpush1.msra.mxu0 %v785
        %807 = vmatprep.subr.mxu0 0.0
        %808 = vmatpush1.msra.mxu0 %v786
        %809 = vmatprep.subr.mxu0 0.0
        %810 = vmatpush1.msra.mxu0 0.0
        %811 = vmatprep.subr.mxu0 0.0
        %812 = vmatpush1.msra.mxu0 0.0
        %813 = vmatprep.subr.mxu0 0.0
        %814 = vmatpush1.msra.mxu0 0.0
        %815 = vmatprep.subr.mxu0 0.0
        %816 = vmatpush1.msra.mxu0 0.0
        %817 = vmatprep.subr.mxu0 0.0
        %818 = vmatpush1.msra.mxu0 0.0
        %819 = vmatprep.subr.mxu0 0.0
        %820 = vmatpush1.msra.mxu0 0.0
        %821 = vmatprep.subr.mxu0 0.0
        %822 = vmatpush1.msra.mxu0 0.0
        %823 = vmatprep.subr.mxu0 0.0
        %824 = vmatpush1.msra.mxu0 0.0
        %825 = vmatprep.subr.mxu0 0.0
        %826 = vmatpush1.msra.mxu0 0.0
        %827 = vmatprep.subr.mxu0 0.0
        %828 = vmatpush1.msra.mxu0 0.0
        %829 = vmatprep.subr.mxu0 0.0
        %830 = vmatpush1.msra.mxu0 0.0
        %831 = vmatprep.subr.mxu0 0.0
        %832 = vmatpush1.msra.mxu0 0.0
        %833 = vmatprep.subr.mxu0 0.0
        %834 = vmatpush1.msra.mxu0 0.0
        %835 = vmatprep.subr.mxu0 0.0
        %836 = vmatpush1.msra.mxu0 0.0
        %837 = vmatprep.subr.mxu0 0.0
        %838 = vmatpush1.msra.mxu0 0.0
        %839 = vmatprep.subr.mxu0 0.0
        %840 = vmatpush1.msra.mxu0 0.0
        %841 = vmatprep.subr.mxu0 0.0
        %842 = vmatpush1.msra.mxu0 0.0
        %843 = vmatprep.subr.mxu0 0.0
        %844 = vmatpush1.msra.mxu0 0.0
        %845 = vmatprep.subr.mxu0 0.0
        %846 = vmatpush1.msra.mxu0 0.0
        %847 = vmatprep.subr.mxu0 0.0
        %848 = vmatpush1.msra.mxu0 0.0
        %849 = vmatprep.subr.mxu0 0.0
        %850 = vmatpush1.msra.mxu0 0.0
        %851 = vmatprep.subr.mxu0 0.0
        %852 = vmatpush1.msra.mxu0 0.0
        %853 = vmatprep.subr.mxu0 0.0
        %854 = vmatpush1.msra.mxu0 0.0
        %855 = vmatprep.subr.mxu0 0.0
        %856 = vmatpush1.msra.mxu0 0.0
        %857 = vmatprep.subr.mxu0 0.0
        %858 = vmatpush1.msra.mxu0 0.0
        %859 = vmatprep.subr.mxu0 0.0
        %860 = vmatpush1.msra.mxu0 0.0
        %861 = vmatprep.subr.mxu0 0.0
        %862 = vmatpush1.msra.mxu0 0.0
        %863 = vmatprep.subr.mxu0 0.0
        %864 = vmatpush1.msra.mxu0 0.0
        %865 = vmatprep.mubr.f32.mxu0 0.0
        %866 = vmatmul.mubr.f32.gmra.mrb[0].mxu0 %v799
        %v867 = vpop.f32.mrb[0].mxu0
        %v868 = vadd.f32 %v797, %v867
        %v869 = vpop.f32.mrb[0].mxu0
        %870 = vdwg.mxu0
        %871 = vst [vmem:[%s327] sm:$0x1] %v868
        %s872 = sand.u32 %s227, 1
        %s873 = scalar_lea.sflag [#allocation4], %s872
        %s874 = sand.u32 %s227, 1
        %s875 = scalar_lea.vmem [#allocation3], %s874
        // Predicated region
        $region57: #{value_approx_forward.1} parent=55 // pred_check
          %p876 = pneg %p237
        $region58: #{value_approx_forward.1} parent=55 // pred_check_branch
          %878 = sbr.rel (%p876) target = $region60
        $region59: #{value_approx_forward.1} parent=55 // pred_region
          %s880 = ssub.s32 16, 16
          %881 = vsyncadd %s873, %s880
          %s882 = smul.addr %s25, 16
          %s883 = scalar_lea.hbm %s9, %s882
          %s885 = sshll.u32 %s875, 4
          %s886 = int_to_ptr.vmem [resolvable:$true] %s885
          %888 = dma.vmem_to_hbm [thread:$0]  %s886, 16, %s883, %s873
        $region60: #{value_approx_forward.1} parent=55 // pred_fallthru
          _
      $region56: #{value_approx_forward.1} parent=5 // pred_fallthru
        _
      %p889 = scmp.le.s32.totalorder 2, %s20
      // Predicated region
      $region61: #{value_approx_forward.1} parent=5 // pred_check
        %p890 = pneg %p889
      $region62: #{value_approx_forward.1} parent=5 // pred_check_branch
        %892 = sbr.rel (%p890) target = $region64
      $region63: #{value_approx_forward.1} parent=5 // pred_region
        %s893 = ssub.s32 %s20, 2
        // Predicated region
        $region65: #{value_approx_forward.1} parent=63 // pred_check
          %p894 = pneg %p243
        $region66: #{value_approx_forward.1} parent=63 // pred_check_branch
          %896 = sbr.rel (%p894) target = $region68
        $region67: #{value_approx_forward.1} parent=63 // pred_region
          %s897 = sand.u32 %s228, 1
          %s898 = scalar_lea.sflag [#allocation4], %s897
          %s899 = sand.u32 %s228, 1
          %s900 = scalar_lea.vmem [#allocation3], %s899
          %901 = dma.done %s898, 16
        $region68: #{value_approx_forward.1} parent=63 // pred_fallthru
          _
      $region64: #{value_approx_forward.1} parent=5 // pred_fallthru
        _
    $region6: #{value_approx_forward.1} parent=1 // loop_footer
      %s24 = sadd.s32 1, %s20
    $region7: #{value_approx_forward.1} parent=1 // loop_footer_branch
      %19 = sbr.rel target = $region3
    $region8: #{value_approx_forward.1} parent=1 // loop_exit
      _
    %902 = vsyncpa [#allocation4], 1
    %s903 = scalar_lea.sflag [#allocation4], 1
    %904 = vsyncpa %s903, 1

</llo_original>
